<compile_context>
chip_gen: v7x
topology: tpu7x:2x2x1
jax: 0.10.0
libtpu: 0.0.40
codegen_flags: <defaults>
</compile_context>

<pallas_src>
import functools

import jax
import jax.numpy as jnp
from jax.experimental import pallas as pl
from jax.experimental.pallas import tpu as pltpu

EPSILON = 1e-06
_VMEM_LIMIT_BYTES = 32 * 1024 * 1024  # explicit scoped-VMEM limit (safe on v5e/v6e/v7x)


def _pick_tile(hw, c):
    """Largest lane tile that divides hw, is a multiple of 128, and keeps a
    (C, TILE) f32 buffer under ~2 MiB so double-buffered in+out stays well
    inside v7x's smaller VMEM."""
    if hw % 128 != 0:
        # BlockSpec last dim must be a multiple of 128 or the full extent.
        return hw
    budget_lanes = max(128, ((2 << 20) // (4 * c)) // 128 * 128)
    tile = min(hw, budget_lanes, 2048)
    while hw % tile != 0:
        tile -= 128
    return tile


def _stats_kernel(x_ref, bias_ref, logscale_ref, sum_ref, sumsq_ref,
                  *, total, epsilon):
    """Accumulate per-channel sum / sum-of-squares over the grid; finalize
    bias = -mean and log_scale = -log(std + eps) on the last grid step."""
    b = pl.program_id(0)
    t = pl.program_id(1)

    @pl.when(jnp.logical_and(b == 0, t == 0))
    def _():
        sum_ref[...] = jnp.zeros_like(sum_ref)
        sumsq_ref[...] = jnp.zeros_like(sumsq_ref)

    x = x_ref[...]                                        # (C, TILE) f32
    sum_ref[...] += jnp.sum(x, axis=1, keepdims=True)     # (C, 1)
    sumsq_ref[...] += jnp.sum(x * x, axis=1, keepdims=True)

    last = jnp.logical_and(b == pl.num_programs(0) - 1,
                           t == pl.num_programs(1) - 1)

    @pl.when(last)
    def _():
        m = jnp.float32(total)
        mean = sum_ref[...] / m
        # torch.std default is unbiased (divide by M-1); one-pass formula.
        var = (sumsq_ref[...] - m * mean * mean) / (m - 1.0)
        std = jnp.sqrt(var)
        bias_ref[...] = -mean
        logscale_ref[...] = -jnp.log(std + epsilon)


def _affine_kernel(x_ref, scale_ref, shift_ref, y_ref):
    """Fused per-channel affine: y = x * scale + shift (both directions)."""
    y_ref[...] = x_ref[...] * scale_ref[...] + shift_ref[...]


class ActNorm:
    """JAX/Pallas port of the PyTorch ActNorm module (Glow)."""

    def __init__(self, in_channel):
        self.in_channel = in_channel
        self.bias = jnp.zeros((1, in_channel, 1, 1), jnp.float32)
        self.log_scale = jnp.ones((1, in_channel, 1, 1), jnp.float32)
        self.is_initialized = False

    # TODO(synk): Python-side state mutation on first call mirrors the PyTorch
    # module but is not jit/vmap friendly (structural, not numerical).
    def _init_params(self, x3, tile):
        n, c, hw = x3.shape
        total = n * hw
        assert total > 1, "ActNorm init needs more than one element per channel"
        grid = (n, hw // tile)
        kern = functools.partial(_stats_kernel, total=float(total), epsilon=EPSILON)
        bias_c, logscale_c = pl.pallas_call(
            kern,
            grid=grid,
            in_specs=[pl.BlockSpec((None, c, tile), lambda b, t: (b, 0, t))],
            out_specs=(
                pl.BlockSpec((c, 1), lambda b, t: (0, 0)),
                pl.BlockSpec((c, 1), lambda b, t: (0, 0)),
            ),
            out_shape=(
                jax.ShapeDtypeStruct((c, 1), jnp.float32),
                jax.ShapeDtypeStruct((c, 1), jnp.float32),
            ),
            scratch_shapes=[pltpu.VMEM((c, 1), jnp.float32),
                            pltpu.VMEM((c, 1), jnp.float32)],
            compiler_params=pltpu.CompilerParams(
                dimension_semantics=("arbitrary", "arbitrary"),
                vmem_limit_bytes=_VMEM_LIMIT_BYTES),
        )(x3)
        self.bias = bias_c.reshape(1, c, 1, 1)
        self.log_scale = logscale_c.reshape(1, c, 1, 1)
        self.is_initialized = True

    def forward(self, x, direction=0):
        n, c, h, w = x.shape
        assert c == self.in_channel
        x = x.astype(jnp.float32)
        hw = h * w
        x3 = x.reshape(n, c, hw)            # free reshape, no HBM transpose
        tile = _pick_tile(hw, c)

        if not self.is_initialized:
            self._init_params(x3, tile)

        bias = self.bias.reshape(c, 1)
        log_scale = self.log_scale.reshape(c, 1)
        if not direction:
            scale_eff = jnp.exp(log_scale)          # (C,1), computed once
            shift_eff = bias
            sign = 1.0
        else:
            inv_scale = jnp.exp(-log_scale)         # multiply, no per-element divide
            scale_eff = inv_scale
            shift_eff = -bias * inv_scale           # (x - b)/s == x*inv - b*inv
            sign = -1.0

        grid = (n, hw // tile)
        y3 = pl.pallas_call(
            _affine_kernel,
            grid=grid,
            in_specs=[
                pl.BlockSpec((None, c, tile), lambda b, t: (b, 0, t)),
                pl.BlockSpec((c, 1), lambda b, t: (0, 0)),   # params resident
                pl.BlockSpec((c, 1), lambda b, t: (0, 0)),
            ],
            out_specs=pl.BlockSpec((None, c, tile), lambda b, t: (b, 0, t)),
            out_shape=jax.ShapeDtypeStruct((n, c, hw), jnp.float32),
            compiler_params=pltpu.CompilerParams(
                dimension_semantics=("parallel", "parallel"),
                vmem_limit_bytes=_VMEM_LIMIT_BYTES),
        )(x3, scale_eff, shift_eff)

        y = y3.reshape(n, c, h, w)          # free reshape back to NCHW

        # log_det depends only on (C,1) log_scale -> plain JAX in the wrapper.
        log_det = sign * float(h * w) * jnp.sum(log_scale)
        log_det = log_det * jnp.ones((n, 1), jnp.float32)
        return y, log_det


# ----------------------------- pure-JAX reference -----------------------------
def _ref_init(x):
    c = x.shape[1]
    flat = jnp.transpose(x, (1, 0, 2, 3)).reshape(c, -1)
    mean = jnp.mean(flat, axis=1)
    std = jnp.std(flat, axis=1, ddof=1)
    bias = (-mean).reshape(1, c, 1, 1)
    log_scale = (-jnp.log(std + EPSILON)).reshape(1, c, 1, 1)
    return bias, log_scale


def _ref_forward(x, bias, log_scale, direction):
    _, _, h, w = x.shape
    x = x.astype(jnp.float32)
    scale = jnp.exp(log_scale)
    log_det = w * h * jnp.sum(log_scale)
    ones = jnp.ones((x.shape[0], 1), jnp.float32)
    if not direction:
        return x * scale + bias, log_det * ones
    return (x - bias) / scale, -log_det * ones


if __name__ == "__main__":
    key = jax.random.PRNGKey(0)
    x = jax.random.normal(key, (2, 4, 16, 16), dtype=jnp.float32)

    layer = ActNorm(in_channel=4)

    # First call: data-dependent init + forward (direction=0).
    y0, ld0 = layer.forward(x, direction=0)
    jax.block_until_ready((y0, ld0))

    # Second call: already initialized, inverse direction.
    y1, ld1 = layer.forward(x, direction=1)
    jax.block_until_ready((y1, ld1))

    # Check against pure-JAX reference.
    ref_bias, ref_logscale = _ref_init(x)
    ry0, rld0 = _ref_forward(x, ref_bias, ref_logscale, 0)
    ry1, rld1 = _ref_forward(x, ref_bias, ref_logscale, 1)

    assert y0.shape == (2, 4, 16, 16) and ld0.shape == (2, 1)
    assert jnp.allclose(y0, ry0, atol=1e-4, rtol=1e-4)
    assert jnp.allclose(ld0, rld0, atol=1e-4, rtol=1e-4)
    assert jnp.allclose(y1, ry1, atol=1e-4, rtol=1e-4)
    assert jnp.allclose(ld1, rld1, atol=1e-4, rtol=1e-4)
    assert jnp.allclose(layer.bias, ref_bias, atol=1e-4, rtol=1e-4)
    assert jnp.allclose(layer.log_scale, ref_logscale, atol=1e-4, rtol=1e-4)

    print("KERNEL_OK")
</pallas_src>

<mosaic_0001>
module attributes {stable_mosaic.version = 11 : i64} {
  func.func @_stats_kernel(%arg0: i32, %arg1: i32, %arg2: memref<1x4x256xf32, #tpu.memory_space<vmem>>, %arg3: memref<4x1xf32, #tpu.memory_space<vmem>>, %arg4: memref<4x1xf32, #tpu.memory_space<vmem>>, %arg5: memref<4x1xf32, #tpu.memory_space<vmem>>, %arg6: memref<4x1xf32, #tpu.memory_space<vmem>>) attributes {dimension_semantics = [#tpu.dimension_semantics<arbitrary>, #tpu.dimension_semantics<arbitrary>], iteration_bounds = array<i64: 2, 1>, scalar_prefetch = 0 : i64, scratch_operands = 2 : i64, tpu.core_type = #tpu.core_type<tc>, window_params = [{transform_indices = @transform_0, window_bounds = array<i64: 1, 4, 256>}, {pipeline_mode = #tpu.pipeline_mode<synchronous>, transform_indices = @transform_1, window_bounds = array<i64: 4, 1>}, {pipeline_mode = #tpu.pipeline_mode<synchronous>, transform_indices = @transform_2, window_bounds = array<i64: 4, 1>}]} {
    %c0_i32 = arith.constant 0 : i32
    %0 = arith.cmpi eq, %arg0, %c0_i32 : i32
    %c0_i32_0 = arith.constant 0 : i32
    %1 = arith.cmpi eq, %arg1, %c0_i32_0 : i32
    %2 = arith.andi %0, %1 : i1
    %3 = arith.extui %2 : i1 to i32
    %c0_i32_1 = arith.constant 0 : i32
    %4 = arith.cmpi ne, %3, %c0_i32_1 : i32
    scf.if %4 {
      %cst_15 = arith.constant 0.000000e+00 : f32
      %23 = vector.broadcast %cst_15 : f32 to vector<4x1xf32>
      %c0_16 = arith.constant 0 : index
      %c0_17 = arith.constant 0 : index
      %24 = vector.load %arg5[%c0_16, %c0_17] : memref<4x1xf32, #tpu.memory_space<vmem>>, vector<4x1xf32>
      tpu.vector_store %arg5[%c0_16, %c0_17], %23 {strides = array<i32>} : memref<4x1xf32, #tpu.memory_space<vmem>>, vector<4x1xf32>,
      %cst_18 = arith.constant 0.000000e+00 : f32
      %25 = vector.broadcast %cst_18 : f32 to vector<4x1xf32>
      %c0_19 = arith.constant 0 : index
      %c0_20 = arith.constant 0 : index
      %26 = vector.load %arg6[%c0_19, %c0_20] : memref<4x1xf32, #tpu.memory_space<vmem>>, vector<4x1xf32>
      tpu.vector_store %arg6[%c0_19, %c0_20], %25 {strides = array<i32>} : memref<4x1xf32, #tpu.memory_space<vmem>>, vector<4x1xf32>,
    } else {
    }
    %c0 = arith.constant 0 : index
    %c0_2 = arith.constant 0 : index
    %c0_3 = arith.constant 0 : index
    %5 = vector.load %arg2[%c0, %c0_2, %c0_3] : memref<1x4x256xf32, #tpu.memory_space<vmem>>, vector<1x4x256xf32>
    %6 = vector.shape_cast %5 : vector<1x4x256xf32> to vector<4x256xf32>
    %c0_4 = arith.constant 0 : index
    %c0_5 = arith.constant 0 : index
    %7 = vector.load %arg5[%c0_4, %c0_5] : memref<4x1xf32, #tpu.memory_space<vmem>>, vector<4x1xf32>
    %cst = arith.constant dense<0.000000e+00> : vector<4xf32>
    %8 = vector.multi_reduction <add>, %6, %cst [1] : vector<4x256xf32> to vector<4xf32>
    %9 = vector.shape_cast %8 : vector<4xf32> to vector<4x1xf32>
    %10 = arith.addf %7, %9 : vector<4x1xf32>
    %c0_6 = arith.constant 0 : index
    %c0_7 = arith.constant 0 : index
    %11 = vector.load %arg5[%c0_6, %c0_7] : memref<4x1xf32, #tpu.memory_space<vmem>>, vector<4x1xf32>
    tpu.vector_store %arg5[%c0_6, %c0_7], %10 {strides = array<i32>} : memref<4x1xf32, #tpu.memory_space<vmem>>, vector<4x1xf32>,
    %c0_8 = arith.constant 0 : index
    %c0_9 = arith.constant 0 : index
    %12 = vector.load %arg6[%c0_8, %c0_9] : memref<4x1xf32, #tpu.memory_space<vmem>>, vector<4x1xf32>
    %13 = arith.mulf %6, %6 : vector<4x256xf32>
    %cst_10 = arith.constant dense<0.000000e+00> : vector<4xf32>
    %14 = vector.multi_reduction <add>, %13, %cst_10 [1] : vector<4x256xf32> to vector<4xf32>
    %15 = vector.shape_cast %14 : vector<4xf32> to vector<4x1xf32>
    %16 = arith.addf %12, %15 : vector<4x1xf32>
    %c0_11 = arith.constant 0 : index
    %c0_12 = arith.constant 0 : index
    %17 = vector.load %arg6[%c0_11, %c0_12] : memref<4x1xf32, #tpu.memory_space<vmem>>, vector<4x1xf32>
    tpu.vector_store %arg6[%c0_11, %c0_12], %16 {strides = array<i32>} : memref<4x1xf32, #tpu.memory_space<vmem>>, vector<4x1xf32>,
    %c1_i32 = arith.constant 1 : i32
    %18 = arith.cmpi eq, %arg0, %c1_i32 : i32
    %c0_i32_13 = arith.constant 0 : i32
    %19 = arith.cmpi eq, %arg1, %c0_i32_13 : i32
    %20 = arith.andi %18, %19 : i1
    %21 = arith.extui %20 : i1 to i32
    %c0_i32_14 = arith.constant 0 : i32
    %22 = arith.cmpi ne, %21, %c0_i32_14 : i32
    scf.if %22 {
      %c0_15 = arith.constant 0 : index
      %c0_16 = arith.constant 0 : index
      %23 = vector.load %arg5[%c0_15, %c0_16] : memref<4x1xf32, #tpu.memory_space<vmem>>, vector<4x1xf32>
      %cst_17 = arith.constant 5.120000e+02 : f32
      %24 = vector.broadcast %cst_17 : f32 to vector<4x1xf32>
      %25 = arith.divf %23, %24 : vector<4x1xf32>
      %c0_18 = arith.constant 0 : index
      %c0_19 = arith.constant 0 : index
      %26 = vector.load %arg6[%c0_18, %c0_19] : memref<4x1xf32, #tpu.memory_space<vmem>>, vector<4x1xf32>
      %cst_20 = arith.constant 5.120000e+02 : f32
      %27 = vector.broadcast %cst_20 : f32 to vector<4x1xf32>
      %28 = arith.mulf %27, %25 : vector<4x1xf32>
      %29 = arith.mulf %28, %25 : vector<4x1xf32>
      %30 = arith.subf %26, %29 : vector<4x1xf32>
      %cst_21 = arith.constant 5.120000e+02 : f32
      %cst_22 = arith.constant 1.000000e+00 : f32
      %31 = arith.subf %cst_21, %cst_22 : f32
      %32 = vector.broadcast %31 : f32 to vector<4x1xf32>
      %33 = arith.divf %30, %32 : vector<4x1xf32>
      %34 = math.sqrt %33 : vector<4x1xf32>
      %cst_23 = arith.constant 0.000000e+00 : f32
      %35 = vector.broadcast %cst_23 : f32 to vector<4x1xf32>
      %36 = arith.subf %35, %25 : vector<4x1xf32>
      %c0_24 = arith.constant 0 : index
      %c0_25 = arith.constant 0 : index
      %37 = vector.load %arg3[%c0_24, %c0_25] : memref<4x1xf32, #tpu.memory_space<vmem>>, vector<4x1xf32>
      tpu.vector_store %arg3[%c0_24, %c0_25], %36 {strides = array<i32>} : memref<4x1xf32, #tpu.memory_space<vmem>>, vector<4x1xf32>,
      %cst_26 = arith.constant 9.99999997E-7 : f32
      %38 = vector.broadcast %cst_26 : f32 to vector<4x1xf32>
      %39 = arith.addf %34, %38 : vector<4x1xf32>
      %40 = math.log %39 : vector<4x1xf32>
      %cst_27 = arith.constant 0.000000e+00 : f32
      %41 = vector.broadcast %cst_27 : f32 to vector<4x1xf32>
      %42 = arith.subf %41, %40 : vector<4x1xf32>
      %c0_28 = arith.constant 0 : index
      %c0_29 = arith.constant 0 : index
      %43 = vector.load %arg4[%c0_28, %c0_29] : memref<4x1xf32, #tpu.memory_space<vmem>>, vector<4x1xf32>
      tpu.vector_store %arg4[%c0_28, %c0_29], %42 {strides = array<i32>} : memref<4x1xf32, #tpu.memory_space<vmem>>, vector<4x1xf32>,
    } else {
    }
    return
  }
  func.func @transform_0(%arg0: i32, %arg1: i32) -> (i32, i32, i32) {
    %c0_i32 = arith.constant 0 : i32
    %c0_i32_0 = arith.constant 0 : i32
    return %arg0, %c0_i32, %arg1 : i32, i32, i32
  }
  func.func @transform_1(%arg0: i32, %arg1: i32) -> (i32, i32) {
    %c0_i32 = arith.constant 0 : i32
    %c0_i32_0 = arith.constant 0 : i32
    %c0_i32_1 = arith.constant 0 : i32
    return %c0_i32, %c0_i32_0 : i32, i32
  }
  func.func @transform_2(%arg0: i32, %arg1: i32) -> (i32, i32) {
    %c0_i32 = arith.constant 0 : i32
    %c0_i32_0 = arith.constant 0 : i32
    %c0_i32_1 = arith.constant 0 : i32
    return %c0_i32, %c0_i32_0 : i32, i32
  }
}

</mosaic_0001>

<llo_original>
// kernel: tpu_custom_call.1
$region0: #{tpu_custom_call.1}
  #allocation0 [shape = 'u32[]', space=smem, size = 0x4, offset = 0x4, fixed_abs, tag = 'smem constant byte address 0x4 - core index']
  #allocation1 [shape = 'u32[144,128]{1,0:T(1,128)}', space=vmem, size = 0x12000, scoped, tag = 'internal scratch']
  #allocation2 [shape = 'f32[4,1]{1,0:T(4,128)}', space=vmem, size = 0x800, scoped, tag = 'scratch operand']
  #allocation3 [shape = 'f32[4,1]{1,0:T(4,128)}', space=vmem, size = 0x800, scoped, tag = 'scratch operand']
  %s0 = inlined_call_operand.hbm [shape: f32[2,4,256], index: 0, kind: input, shape index: {}]
  %s1 = inlined_call_operand.vmem [shape: f32[4,1], index: 1, kind: output, shape index: {0}]
  %s2 = inlined_call_operand.vmem [shape: f32[4,1], index: 2, kind: output, shape index: {1}]
  %3 = xla_tuple %s1, %s2
  %s4 = sld [smem:[#allocation0]]
  $region57: #{tpu_custom_call.1} parent=0
    _
  %s6 = ssub.s32 1, %s4
  %s7 = scalar_select 0, %s6, %s4
  $region1: #{tpu_custom_call.1} parent=0
    #allocation4 [shape = 'u8[8192]{0}', space=vmem, size = 0x2000, scoped, tag = 'input window, operand 0']
    #allocation5 [shape = 's32[2]{0}', space=sflag, size = 0x8, scoped, tag = 'scoped memory for tpu_custom_call.1']
    %8 = vsyncpa [#allocation5], 0
    %s9 = scalar_lea.sflag [#allocation5], 1
    %10 = vsyncpa %s9, 0
    loop: start=0, step=1, limit=4
    $region2: #{tpu_custom_call.1} parent=1 // loop_pre_header
      _
    $region3: #{tpu_custom_call.1} parent=1 // loop_header
      %s12 = sphi 0, %s16
      %p13 = scmp.ge.s32.totalorder %s12, 4
      %s19 = sphi 0, %s31
      %s20 = sphi 0, %s27
      %s21 = sphi 0, %s19
      %s22 = sphi 0, %s20
      %s23 = sphi 0, %s21
      %s24 = sphi 0, %s22
      %s36 = sphi 0, %s38
      %s39 = sphi 0, %s36
      %s40 = sphi 0, %s39
      %s56 = sphi 0, %s40
      %s60 = sphi 0, %s60
      %s62 = sphi 0, %s60
      %s63 = sphi 0, %s62
      %s77 = sphi 0, %s63
      %s81 = sphi 0, %s81
      %s83 = sphi 0, %s81
      %s84 = sphi 0, %s83
      %s98 = sphi 0, %s84
    $region4: #{tpu_custom_call.1} parent=1 // loop_header_branch
      %15 = sbr.rel (%p13) target = $region8
    $region5: #{tpu_custom_call.1} parent=1 // loop_body
      %s17 = ssub.s32 %s12, 1
      %s18 = ssub.s32 %s12, 2
      %s25 = sadd.s32 1, %s20
      %p26 = scmp.ge.s32.totalorder %s25, 1
      %s27 = scalar_select %p26, 0, %s25
      %s28 = sadd.s32 1, %s19
      %s29 = scalar_select %p26, %s28, %s19
      %p30 = scmp.ge.s32.totalorder %s29, 2
      %s31 = scalar_select %p30, 0, %s29
      %s32 = ssub.s32 %s19, %s31
      %s33 = ssub.s32 %s20, %s27
      %s34 = sor.u32 %s32, %s33
      %p35 = scmp.eq.s32.totalorder %s34, 0
      %s37 = sadd.s32 %s36, 1
      %s38 = scalar_select %p35, %s36, %s37
      %p41 = pneg %p35
      %p42 = scmp.eq.s32.totalorder %s12, 1
      %p43 = por %p41, %p42
      %p44 = scmp.ne.s32.totalorder %s36, %s39
      %p45 = scmp.eq.s32.totalorder %s12, 0
      %p46 = por %p44, %p45
      %p47 = scmp.ne.s32.totalorder %s36, %s39
      %p48 = scmp.eq.s32.totalorder %s17, 1
      %p49 = por %p47, %p48
      %p50 = scmp.ne.s32.totalorder %s39, %s40
      %p51 = scmp.eq.s32.totalorder %s17, 0
      %p52 = por %p50, %p51
      %p53 = scmp.ne.s32.totalorder %s39, %s40
      %p54 = scmp.eq.s32.totalorder %s18, 1
      %p55 = por %p53, %p54
      %p57 = scmp.ne.s32.totalorder %s40, %s56
      %p58 = scmp.eq.s32.totalorder %s18, 0
      %p59 = por %p57, %p58
      %s61 = sadd.s32 %s60, 1
      %p64 = scmp.eq.s32.totalorder %s12, 1
      %p65 = scmp.ne.s32.totalorder %s60, %s62
      %p66 = scmp.eq.s32.totalorder %s12, 0
      %p67 = por %p65, %p66
      %p68 = scmp.ne.s32.totalorder %s60, %s62
      %p69 = scmp.eq.s32.totalorder %s17, 1
      %p70 = por %p68, %p69
      %p71 = scmp.ne.s32.totalorder %s62, %s63
      %p72 = scmp.eq.s32.totalorder %s17, 0
      %p73 = por %p71, %p72
      %p74 = scmp.ne.s32.totalorder %s62, %s63
      %p75 = scmp.eq.s32.totalorder %s18, 1
      %p76 = por %p74, %p75
      %p78 = scmp.ne.s32.totalorder %s63, %s77
      %p79 = scmp.eq.s32.totalorder %s18, 0
      %p80 = por %p78, %p79
      %s82 = sadd.s32 %s81, 1
      %p85 = scmp.eq.s32.totalorder %s12, 1
      %p86 = scmp.ne.s32.totalorder %s81, %s83
      %p87 = scmp.eq.s32.totalorder %s12, 0
      %p88 = por %p86, %p87
      %p89 = scmp.ne.s32.totalorder %s81, %s83
      %p90 = scmp.eq.s32.totalorder %s17, 1
      %p91 = por %p89, %p90
      %p92 = scmp.ne.s32.totalorder %s83, %s84
      %p93 = scmp.eq.s32.totalorder %s17, 0
      %p94 = por %p92, %p93
      %p95 = scmp.ne.s32.totalorder %s83, %s84
      %p96 = scmp.eq.s32.totalorder %s18, 1
      %p97 = por %p95, %p96
      %p99 = scmp.ne.s32.totalorder %s84, %s98
      %p100 = scmp.eq.s32.totalorder %s18, 0
      %p101 = por %p99, %p100
      %p102 = scmp.le.s32.totalorder 1, %s12
      %p103 = scmp.lt.s32.totalorder %s12, 3
      %p104 = pnand %p102, %p103
      %p105 = pneg %p104
      // Predicated region
      $region9: #{tpu_custom_call.1} parent=5 // pred_check
        _
      $region10: #{tpu_custom_call.1} parent=5 // pred_check_branch
        %107 = sbr.rel (%p104) target = $region12
      $region11: #{tpu_custom_call.1} parent=5 // pred_region
        %s108 = ssub.s32 %s12, 1
      $region12: #{tpu_custom_call.1} parent=5 // pred_fallthru
        _
      %p109 = scmp.lt.s32.totalorder %s12, 2
      // Predicated region
      $region13: #{tpu_custom_call.1} parent=5 // pred_check
        %p110 = pneg %p109
      $region14: #{tpu_custom_call.1} parent=5 // pred_check_branch
        %112 = sbr.rel (%p110) target = $region16
      $region15: #{tpu_custom_call.1} parent=5 // pred_region
        // Predicated region
        $region17: #{tpu_custom_call.1} parent=15 // pred_check
          %p113 = pneg %p46
        $region18: #{tpu_custom_call.1} parent=15 // pred_check_branch
          %115 = sbr.rel (%p113) target = $region20
        $region19: #{tpu_custom_call.1} parent=15 // pred_region
          %s116 = sand.u32 %s36, 1
          %s117 = scalar_lea.sflag [#allocation5], %s116
          %s118 = sand.u32 %s36, 1
          %s119 = smul.addr %s118, 8
          %s120 = scalar_lea.vmem [#allocation4], %s119
          %s121 = smul.u32 2, %s20
          %s123 = ssub.s32 128, 128
          %124 = vsyncadd %s117, %s123
          %s125 = smul.addr %s19, 2
          %s126 = sadd.s32 %s121, %s125
          %s127 = smul.addr %s126, 64
          %s128 = scalar_lea.hbm %s0, %s127
          %s130 = sshll.u32 %s120, 4
          %s131 = int_to_ptr.vmem [resolvable:$true] %s130
          %133 = dma.hbm_to_vmem [thread:$0]  %s128, 128, %s131, %s117
        $region20: #{tpu_custom_call.1} parent=15 // pred_fallthru
          _
      $region16: #{tpu_custom_call.1} parent=5 // pred_fallthru
        _
      %p134 = scmp.le.s32.totalorder 1, %s12
      %p135 = scmp.lt.s32.totalorder %s12, 3
      %p136 = pnand %p134, %p135
      %p137 = pneg %p136
      // Predicated region
      $region21: #{tpu_custom_call.1} parent=5 // pred_check
        _
      $region22: #{tpu_custom_call.1} parent=5 // pred_check_branch
        %139 = sbr.rel (%p136) target = $region24
      $region23: #{tpu_custom_call.1} parent=5 // pred_region
        %s140 = ssub.s32 %s12, 1
        %s141 = sand.u32 %s39, 1
        %s142 = scalar_lea.sflag [#allocation5], %s141
        %s143 = sand.u32 %s39, 1
        %s144 = smul.addr %s143, 8
        %s145 = scalar_lea.vmem [#allocation4], %s144
        // Predicated region
        $region25: #{tpu_custom_call.1} parent=23 // pred_check
          %p146 = pneg %p52
        $region26: #{tpu_custom_call.1} parent=23 // pred_check_branch
          %148 = sbr.rel (%p146) target = $region28
        $region27: #{tpu_custom_call.1} parent=23 // pred_region
          %149 = dma.done %s142, 128
        $region28: #{tpu_custom_call.1} parent=23 // pred_fallthru
          _
        %s150 = sand.u32 %s39, 1
        %s151 = scalar_lea.sflag [#allocation5], %s150
        %s152 = sand.u32 %s39, 1
        %s153 = smul.addr %s152, 8
        %s154 = scalar_lea.vmem [#allocation4], %s153
        %p155 = pneg %p52
        %p156 = pneg %p49
        %p157 = pneg %p73
        %p158 = pneg %p70
        %p159 = pneg %p94
        %p160 = pneg %p91
        %s161 = smul.u32 2, %s22
        %p162 = scmp.eq.s32.totalorder %s21, 0
        %p163 = scmp.eq.s32.totalorder %s22, 0
        %p164 = pnand %p162, %p163
        %p165 = pneg %p164
        // Predicated region
        $region29: #{tpu_custom_call.1} parent=23 // pred_check
          _
        $region30: #{tpu_custom_call.1} parent=23 // pred_check_branch
          %167 = sbr.rel (%p164) target = $region32
        $region31: #{tpu_custom_call.1} parent=23 // pred_region
          %vm168 = vcmask 3072
          %169 = vst.msk [vmem:[#allocation2] sm:$0xf] %vm168, 0.0
          %170 = vst.msk [vmem:[#allocation3] sm:$0xf] %vm168, 0.0
        $region32: #{tpu_custom_call.1} parent=23 // pred_fallthru
          _
        %v171 = vld [vmem:[%s145] sm:$0xff]
        %v172 = vld [vmem:[#allocation2] sm:$0xf]
        %v174 = vcombine.high %v171, %v171
        %vm176 = vcmask 1043456
        %v177 = vsel %vm176, %v171, 0.0
        %v178 = vsel %vm176, %v174, 0.0
        %v179 = vadd.f32 %v177, %v178
        %180 = vadd.xlane.f32.xlu0 %v179
        %v181 = vpop.xlane.xlu0 %180
        %v182 = vadd.f32 %v172, %v181
        %vm183 = vcmask 3072
        %184 = vst.msk [vmem:[#allocation2] sm:$0xf] %vm183, %v182
        %v185 = vld [vmem:[#allocation3] sm:$0xf]
        %v186 = vmul.f32 %v171, %v171
        %v188 = vcombine.high %v186, %v186
        %v190 = vsel %vm176, %v186, 0.0
        %v191 = vsel %vm176, %v188, 0.0
        %v192 = vadd.f32 %v190, %v191
        %193 = vadd.xlane.f32.xlu0 %v192
        %v194 = vpop.xlane.xlu0 %193
        %v195 = vadd.f32 %v185, %v194
        %196 = vst.msk [vmem:[#allocation3] sm:$0xf] %vm183, %v195
        %p197 = scmp.eq.s32.totalorder %s21, 1
        %p198 = pnand %p197, %p163
        %p199 = pneg %p198
        // Predicated region
        $region33: #{tpu_custom_call.1} parent=23 // pred_check
          _
        $region34: #{tpu_custom_call.1} parent=23 // pred_check_branch
          %201 = sbr.rel (%p198) target = $region36
        $region35: #{tpu_custom_call.1} parent=23 // pred_region
          %v202 = vld [vmem:[#allocation2] sm:$0xf]
          %v203 = vrcp.pop 512.0
          %v204 = vmul.f32 %v202, %v203
          %v205 = vld [vmem:[#allocation3] sm:$0xf]
          %v206 = vmul.f32 %v204, 512.0
          %v207 = vmul.f32 %v206, %v204
          %v208 = vsub.f32 %v205, %v207
          %v209 = vrcp.pop 511.0
          %v210 = vmul.f32 %v208, %v209
          %v211 = vrsqrt.pop %v210
          %v212 = vmul.f32 %v210, %v211
          %vm213 = vcmp.eq.f32.partialorder %v210, inf
          %v214 = vsel %vm213, %v210, %v212
          %vm215 = vcmp.eq.f32.partialorder %v210, 0.0
          %v216 = vand.u32 %v210, 2147483648
          %v217 = vsel %vm215, %v216, %v214
          %v218 = vsub.f32 0.0, %v204
          %219 = vst.msk [vmem:[%s1] sm:$0xf] %vm183, %v218
          %v220 = vadd.f32 %v217, 1e-06
          %v221 = vlog2.pop %v220
          %v222 = vmul.f32 %v221, 0.6931472
          %v223 = vsub.f32 0.0, %v222
          %224 = vst.msk [vmem:[%s2] sm:$0xf] %vm183, %v223
        $region36: #{tpu_custom_call.1} parent=23 // pred_fallthru
          _
        // Predicated region
        $region37: #{tpu_custom_call.1} parent=23 // pred_check
          %p225 = pneg %p70
        $region38: #{tpu_custom_call.1} parent=23 // pred_check_branch
          %227 = sbr.rel (%p225) target = $region40
        $region39: #{tpu_custom_call.1} parent=23 // pred_region
          _
        $region40: #{tpu_custom_call.1} parent=23 // pred_fallthru
          _
        // Predicated region
        $region41: #{tpu_custom_call.1} parent=23 // pred_check
          %p228 = pneg %p91
        $region42: #{tpu_custom_call.1} parent=23 // pred_check_branch
          %230 = sbr.rel (%p228) target = $region44
        $region43: #{tpu_custom_call.1} parent=23 // pred_region
          _
        $region44: #{tpu_custom_call.1} parent=23 // pred_fallthru
          _
        // Predicated region
        $region45: #{tpu_custom_call.1} parent=23 // pred_check
          %p231 = pneg %p70
        $region46: #{tpu_custom_call.1} parent=23 // pred_check_branch
          %233 = sbr.rel (%p231) target = $region48
        $region47: #{tpu_custom_call.1} parent=23 // pred_region
          _
        $region48: #{tpu_custom_call.1} parent=23 // pred_fallthru
          _
        // Predicated region
        $region49: #{tpu_custom_call.1} parent=23 // pred_check
          %p234 = pneg %p91
        $region50: #{tpu_custom_call.1} parent=23 // pred_check_branch
          %236 = sbr.rel (%p234) target = $region52
        $region51: #{tpu_custom_call.1} parent=23 // pred_region
          _
        $region52: #{tpu_custom_call.1} parent=23 // pred_fallthru
          _
      $region24: #{tpu_custom_call.1} parent=5 // pred_fallthru
        _
      %p237 = scmp.le.s32.totalorder 2, %s12
      // Predicated region
      $region53: #{tpu_custom_call.1} parent=5 // pred_check
        %p238 = pneg %p237
      $region54: #{tpu_custom_call.1} parent=5 // pred_check_branch
        %240 = sbr.rel (%p238) target = $region56
      $region55: #{tpu_custom_call.1} parent=5 // pred_region
        %s241 = ssub.s32 %s12, 2
      $region56: #{tpu_custom_call.1} parent=5 // pred_fallthru
        _
    $region6: #{tpu_custom_call.1} parent=1 // loop_footer
      %s16 = sadd.s32 1, %s12
    $region7: #{tpu_custom_call.1} parent=1 // loop_footer_branch
      %11 = sbr.rel target = $region3
    $region8: #{tpu_custom_call.1} parent=1 // loop_exit
      _
    %242 = vsyncpa [#allocation5], 1
    %s243 = scalar_lea.sflag [#allocation5], 1
    %244 = vsyncpa %s243, 1

</llo_original>
